<compile_context>
chip_gen: v7x
topology: tpu7x:2x2x1
jax: 0.10.0
libtpu: 0.0.40
codegen_flags: <defaults>
</compile_context>

<pallas_src>
import jax
import jax.numpy as jnp
from jax.experimental import pallas as pl
from jax.experimental.pallas import tpu as pltpu


# ---------------------------------------------------------------------------
# Matmul kernels
# ---------------------------------------------------------------------------
def _matmul_fullk_kernel(a_ref, b_ref, o_ref):
    # Full-K strips resident in VMEM: one MXU call per output tile.
    o_ref[...] = jnp.dot(
        a_ref[...], b_ref[...], preferred_element_type=jnp.float32
    ).astype(o_ref.dtype)


def _matmul_acc_kernel(a_ref, b_ref, o_ref, acc_ref):
    # K-tiled reduction path (only used for very large K).
    @pl.when(pl.program_id(2) == 0)
    def _():
        acc_ref[...] = jnp.zeros_like(acc_ref)

    acc_ref[...] += jnp.dot(
        a_ref[...], b_ref[...], preferred_element_type=jnp.float32
    )

    @pl.when(pl.program_id(2) == pl.num_programs(2) - 1)
    def _():
        o_ref[...] = acc_ref[...].astype(o_ref.dtype)


def _pick_tile(dim, candidates):
    for c in candidates:
        if dim % c == 0:
            return c
    return candidates[-1]


def pallas_matmul(a, b, *, vmem_limit_bytes=48 * 1024 * 1024):
    M, K = a.shape
    K2, N = b.shape
    assert K == K2, "inner dims must match"
    assert M % 128 == 0 and N % 128 == 0 and K % 128 == 0, (
        "this demo kernel assumes 128-aligned matmul shapes"
    )

    # Fat tiles keep the MXU fed and per-step overhead (~0.35 us) amortized.
    tm = _pick_tile(M, (512, 256, 128))
    tn = _pick_tile(N, (512, 256, 128))

    if K <= 2048:
        # Full-K path: no reduction grid axis, no accumulator scratch.
        return pl.pallas_call(
            _matmul_fullk_kernel,
            out_shape=jax.ShapeDtypeStruct((M, N), a.dtype),
            grid_spec=pltpu.PrefetchScalarGridSpec(
                num_scalar_prefetch=0,
                grid=(M // tm, N // tn),
                in_specs=[
                    pl.BlockSpec((tm, K), lambda i, j: (i, 0)),
                    pl.BlockSpec((K, tn), lambda i, j: (0, j)),
                ],
                out_specs=pl.BlockSpec((tm, tn), lambda i, j: (i, j)),
            ),
            compiler_params=pltpu.CompilerParams(
                dimension_semantics=("parallel", "parallel"),
                vmem_limit_bytes=vmem_limit_bytes,
            ),
        )(a, b)

    # Large-K fallback: tiled reduction with a long K block (reduction axis
    # last in the grid, marked "arbitrary").
    tk = _pick_tile(K, (2048, 1024, 512, 256, 128))
    return pl.pallas_call(
        _matmul_acc_kernel,
        out_shape=jax.ShapeDtypeStruct((M, N), a.dtype),
        grid_spec=pltpu.PrefetchScalarGridSpec(
            num_scalar_prefetch=0,
            grid=(M // tm, N // tn, K // tk),
            in_specs=[
                pl.BlockSpec((tm, tk), lambda i, j, k: (i, k)),
                pl.BlockSpec((tk, tn), lambda i, j, k: (k, j)),
            ],
            out_specs=pl.BlockSpec((tm, tn), lambda i, j, k: (i, j)),
            scratch_shapes=[pltpu.VMEM((tm, tn), jnp.float32)],
        ),
        compiler_params=pltpu.CompilerParams(
            dimension_semantics=("parallel", "parallel", "arbitrary"),
            vmem_limit_bytes=vmem_limit_bytes,
        ),
    )(a, b)


# ---------------------------------------------------------------------------
# Fused elementwise kernel: r = relu(x + y)
# ---------------------------------------------------------------------------
def _add_relu_kernel(x_ref, y_ref, r_ref):
    z = x_ref[...] + y_ref[...]
    r_ref[...] = jnp.maximum(z, jnp.zeros_like(z))


def _choose_block_rows(rows, max_rows):
    for cand in (512, 256, 128, 64, 32, 16, 8):
        if cand <= max_rows and rows % cand == 0:
            return cand
    return None


def pallas_add_relu(x, y, *, lanes=1024, max_block_rows=512):
    assert x.shape == y.shape and x.dtype == y.dtype
    orig_shape = x.shape
    n = x.size
    itemsize = jnp.dtype(x.dtype).itemsize

    xf = x.reshape(-1)
    yf = y.reshape(-1)

    rows = -(-n // lanes)  # ceil(n / lanes)

    if rows * lanes * itemsize <= (4 << 20):
        # Small input (the demo case): one lane-dense block over the whole
        # slab.  block == full array dims so no (8,128) divisibility needed.
        block_rows = rows
        rows_padded = rows
    else:
        block_rows = _choose_block_rows(rows, max_block_rows)
        if block_rows is None:
            # Ragged row count on a large input: round rows up to the tile.
            block_rows = max_block_rows
            rows_padded = -(-rows // block_rows) * block_rows
        else:
            rows_padded = rows

    pad = rows_padded * lanes - n
    if pad:
        # Only taken when the flat size is not already block-aligned.
        xf = jnp.pad(xf, (0, pad))
        yf = jnp.pad(yf, (0, pad))
    xf = xf.reshape(rows_padded, lanes)
    yf = yf.reshape(rows_padded, lanes)

    out = pl.pallas_call(
        _add_relu_kernel,
        out_shape=jax.ShapeDtypeStruct((rows_padded, lanes), x.dtype),
        grid_spec=pltpu.PrefetchScalarGridSpec(
            num_scalar_prefetch=0,
            grid=(rows_padded // block_rows,),
            in_specs=[
                pl.BlockSpec((block_rows, lanes), lambda i: (i, 0)),
                pl.BlockSpec((block_rows, lanes), lambda i: (i, 0)),
            ],
            out_specs=pl.BlockSpec((block_rows, lanes), lambda i: (i, 0)),
        ),
        compiler_params=pltpu.CompilerParams(
            dimension_semantics=("parallel",)
        ),
    )(xf, yf)

    out = out.reshape(-1)
    if pad:
        out = out[:n]
    return out.reshape(orig_shape)


# ---------------------------------------------------------------------------
# Module wrapper: forward(A, B, x, y) -> (C, r)
# ---------------------------------------------------------------------------
@jax.jit
def fcuda_gpu_cuda_speed_up_forward(A, B, x, y):
    C = pallas_matmul(A, B)
    r = pallas_add_relu(x, y)
    return C, r


if __name__ == "__main__":
    key = jax.random.PRNGKey(0)
    kA, kB, kx, ky = jax.random.split(key, 4)

    # Small shapes consistent with the forward: 2-D matmul operands plus
    # arbitrary-rank elementwise tensors.
    M, K, N = 128, 256, 128
    A = jax.random.normal(kA, (M, K), dtype=jnp.float32)
    B = jax.random.normal(kB, (K, N), dtype=jnp.float32)
    x = jax.random.normal(kx, (2, 4, 16, 16), dtype=jnp.float32)
    y = jax.random.normal(ky, (2, 4, 16, 16), dtype=jnp.float32)

    C, r = fcuda_gpu_cuda_speed_up_forward(A, B, x, y)
    jax.block_until_ready((C, r))

    # Correctness check against plain-JAX reference.
    C_ref = A @ B
    r_ref = jnp.maximum(x + y, 0.0)
    assert jnp.allclose(C, C_ref, atol=1e-3, rtol=1e-3), "matmul mismatch"
    assert jnp.allclose(r, r_ref), "add+relu mismatch"

    # TODO(synk): the custom autograd backward passes (MatMulFunction.backward raises
    # even in torch) are not part of the forward semantics and are not implemented.
    print("KERNEL_OK")
</pallas_src>

<mosaic_0001>
module attributes {stable_mosaic.version = 11 : i64} {
  func.func @_add_relu_kernel(%arg0: i32, %arg1: memref<2x1024xf32, #tpu.memory_space<vmem>>, %arg2: memref<2x1024xf32, #tpu.memory_space<vmem>>, %arg3: memref<2x1024xf32, #tpu.memory_space<vmem>>) attributes {dimension_semantics = [#tpu.dimension_semantics<parallel>], iteration_bounds = array<i64: 1>, scalar_prefetch = 0 : i64, scratch_operands = 0 : i64, tpu.core_type = #tpu.core_type<tc>, window_params = [{transform_indices = @transform_0, window_bounds = array<i64: 2, 1024>}, {transform_indices = @transform_1, window_bounds = array<i64: 2, 1024>}, {transform_indices = @transform_2, window_bounds = array<i64: 2, 1024>}]} {
    %c0 = arith.constant 0 : index
    %c0_0 = arith.constant 0 : index
    %0 = vector.load %arg1[%c0, %c0_0] : memref<2x1024xf32, #tpu.memory_space<vmem>>, vector<2x1024xf32>
    %c0_1 = arith.constant 0 : index
    %c0_2 = arith.constant 0 : index
    %1 = vector.load %arg2[%c0_1, %c0_2] : memref<2x1024xf32, #tpu.memory_space<vmem>>, vector<2x1024xf32>
    %2 = arith.addf %0, %1 : vector<2x1024xf32>
    %cst = arith.constant 0.000000e+00 : f32
    %3 = vector.broadcast %cst : f32 to vector<2x1024xf32>
    %4 = arith.maximumf %2, %3 : vector<2x1024xf32>
    %c0_3 = arith.constant 0 : index
    %c0_4 = arith.constant 0 : index
    %5 = vector.load %arg3[%c0_3, %c0_4] : memref<2x1024xf32, #tpu.memory_space<vmem>>, vector<2x1024xf32>
    tpu.vector_store %arg3[%c0_3, %c0_4], %4 {strides = array<i32>} : memref<2x1024xf32, #tpu.memory_space<vmem>>, vector<2x1024xf32>,
    return
  }
  func.func @transform_0(%arg0: i32) -> (i32, i32) {
    %c0_i32 = arith.constant 0 : i32
    %c0_i32_0 = arith.constant 0 : i32
    return %arg0, %c0_i32 : i32, i32
  }
  func.func @transform_1(%arg0: i32) -> (i32, i32) {
    %c0_i32 = arith.constant 0 : i32
    %c0_i32_0 = arith.constant 0 : i32
    return %arg0, %c0_i32 : i32, i32
  }
  func.func @transform_2(%arg0: i32) -> (i32, i32) {
    %c0_i32 = arith.constant 0 : i32
    %c0_i32_0 = arith.constant 0 : i32
    return %arg0, %c0_i32 : i32, i32
  }
}

module attributes {stable_mosaic.version = 11 : i64} {
  func.func @_matmul_fullk_kernel(%arg0: i32, %arg1: i32, %arg2: memref<128x256xf32, #tpu.memory_space<vmem>>, %arg3: memref<256x128xf32, #tpu.memory_space<vmem>>, %arg4: memref<128x128xf32, #tpu.memory_space<vmem>>) attributes {dimension_semantics = [#tpu.dimension_semantics<parallel>, #tpu.dimension_semantics<parallel>], iteration_bounds = array<i64: 1, 1>, scalar_prefetch = 0 : i64, scratch_operands = 0 : i64, tpu.core_type = #tpu.core_type<tc>, window_params = [{transform_indices = @transform_0, window_bounds = array<i64: 128, 256>}, {transform_indices = @transform_1, window_bounds = array<i64: 256, 128>}, {transform_indices = @transform_2, window_bounds = array<i64: 128, 128>}]} {
    %c0 = arith.constant 0 : index
    %c0_0 = arith.constant 0 : index
    %0 = vector.load %arg2[%c0, %c0_0] : memref<128x256xf32, #tpu.memory_space<vmem>>, vector<128x256xf32>
    %c0_1 = arith.constant 0 : index
    %c0_2 = arith.constant 0 : index
    %1 = vector.load %arg3[%c0_1, %c0_2] : memref<256x128xf32, #tpu.memory_space<vmem>>, vector<256x128xf32>
    %cst = arith.constant dense<0.000000e+00> : vector<128x128xf32>
    %2 = tpu.matmul %0, %1, %cst {dimension_numbers = #tpu.dot_dimension_numbers<[1], [0], [0], [1], [0, 0, 1, 1], [], []>} : vector<128x256xf32>, vector<256x128xf32>, vector<128x128xf32> -> vector<128x128xf32>
    %c0_3 = arith.constant 0 : index
    %c0_4 = arith.constant 0 : index
    %3 = vector.load %arg4[%c0_3, %c0_4] : memref<128x128xf32, #tpu.memory_space<vmem>>, vector<128x128xf32>
    tpu.vector_store %arg4[%c0_3, %c0_4], %2 {strides = array<i32>} : memref<128x128xf32, #tpu.memory_space<vmem>>, vector<128x128xf32>,
    return
  }
  func.func @transform_0(%arg0: i32, %arg1: i32) -> (i32, i32) {
    %c0_i32 = arith.constant 0 : i32
    %c0_i32_0 = arith.constant 0 : i32
    return %arg0, %c0_i32 : i32, i32
  }
  func.func @transform_1(%arg0: i32, %arg1: i32) -> (i32, i32) {
    %c0_i32 = arith.constant 0 : i32
    %c0_i32_0 = arith.constant 0 : i32
    return %c0_i32, %arg1 : i32, i32
  }
  func.func @transform_2(%arg0: i32, %arg1: i32) -> (i32, i32) {
    %c0_i32 = arith.constant 0 : i32
    return %arg0, %arg1 : i32, i32
  }
}

</mosaic_0001>

<llo_original>
// kernel: fcuda_gpu_cuda_speed_up_forward.3
$region0: #{fcuda_gpu_cuda_speed_up_forward.3}
  #allocation0 [shape = 'u32[]', space=smem, size = 0x4, offset = 0x4, fixed_abs, tag = 'smem constant byte address 0x4 - core index']
  #allocation1 [shape = 'u32[144,128]{1,0:T(1,128)}', space=vmem, size = 0x12000, scoped, tag = 'internal scratch']
  %s0 = inlined_call_operand.vmem [shape: f32[2,1024], index: 0, kind: input, shape index: {}]
  %s1 = inlined_call_operand.vmem [shape: f32[2,1024], index: 1, kind: input, shape index: {}]
  %s2 = inlined_call_operand.vmem [shape: f32[2,1024], index: 2, kind: output, shape index: {}]
  %s3 = sld [smem:[#allocation0]]
  $region18: #{fcuda_gpu_cuda_speed_up_forward.3} parent=0
    _
  %s5 = ssub.s32 1, %s3
  %s6 = scalar_select 0, %s5, %s3
  // Predicated region
  $region2: #{fcuda_gpu_cuda_speed_up_forward.3} parent=0 // pred_check
    _
  $region3: #{fcuda_gpu_cuda_speed_up_forward.3} parent=0 // pred_check_branch
    %8 = sbr.rel (0) target = $region5
  $region4: #{fcuda_gpu_cuda_speed_up_forward.3} parent=0 // pred_region
    _
  $region5: #{fcuda_gpu_cuda_speed_up_forward.3} parent=0 // pred_fallthru
    _
  // Predicated region
  $region6: #{fcuda_gpu_cuda_speed_up_forward.3} parent=0 // pred_check
    _
  $region7: #{fcuda_gpu_cuda_speed_up_forward.3} parent=0 // pred_check_branch
    %10 = sbr.rel (0) target = $region9
  $region8: #{fcuda_gpu_cuda_speed_up_forward.3} parent=0 // pred_region
    _
  $region9: #{fcuda_gpu_cuda_speed_up_forward.3} parent=0 // pred_fallthru
    _
  %v11 = vld [vmem:[%s0] sm:$0xff]
  %v12 = vld [vmem:[%s0 + $0x8] sm:$0xff]
  %v13 = vld [vmem:[%s1] sm:$0xff]
  %v14 = vld [vmem:[%s1 + $0x8] sm:$0xff]
  %v15 = vadd.f32 %v11, %v13
  %v16 = vadd.f32 %v12, %v14
  %v17 = vmax.f32 %v15, 0.0
  %v18 = vmax.f32 %v16, 0.0
  %19 = vst [vmem:[%s2] sm:$0xff] %v17
  %20 = vst [vmem:[%s2 + $0x8] sm:$0xff] %v18
  // Predicated region
  $region10: #{fcuda_gpu_cuda_speed_up_forward.3} parent=0 // pred_check
    _
  $region11: #{fcuda_gpu_cuda_speed_up_forward.3} parent=0 // pred_check_branch
    %22 = sbr.rel (0) target = $region13
  $region12: #{fcuda_gpu_cuda_speed_up_forward.3} parent=0 // pred_region
    _
  $region13: #{fcuda_gpu_cuda_speed_up_forward.3} parent=0 // pred_fallthru
    _
  // Predicated region
  $region14: #{fcuda_gpu_cuda_speed_up_forward.3} parent=0 // pred_check
    _
  $region15: #{fcuda_gpu_cuda_speed_up_forward.3} parent=0 // pred_check_branch
    %24 = sbr.rel (0) target = $region17
  $region16: #{fcuda_gpu_cuda_speed_up_forward.3} parent=0 // pred_region
    _
  $region17: #{fcuda_gpu_cuda_speed_up_forward.3} parent=0 // pred_fallthru
    _

// kernel: fcuda_gpu_cuda_speed_up_forward.2
$region0: #{fcuda_gpu_cuda_speed_up_forward.2}
  #allocation0 [shape = 'u32[]', space=smem, size = 0x4, offset = 0x4, fixed_abs, tag = 'smem constant byte address 0x4 - core index']
  #allocation1 [shape = 'u32[144,128]{1,0:T(1,128)}', space=vmem, size = 0x12000, scoped, tag = 'internal scratch']
  %s0 = inlined_call_operand.vmem [shape: f32[128,256], index: 0, kind: input, shape index: {}]
  %s1 = inlined_call_operand.hbm [shape: f32[256,128], index: 1, kind: input, shape index: {}]
  %s2 = inlined_call_operand.hbm [shape: f32[128,128], index: 2, kind: output, shape index: {}]
  %s3 = sld [smem:[#allocation0]]
  $region22: #{fcuda_gpu_cuda_speed_up_forward.2} parent=0
    _
  %s5 = ssub.s32 1, %s3
  %s6 = scalar_select 0, %s5, %s3
  $region1: #{fcuda_gpu_cuda_speed_up_forward.2} parent=0
    #allocation2 [shape = 'u8[131072]{0}', space=vmem, size = 0x20000, scoped, tag = 'input window, operand 1, single buffered']
    #allocation3 [shape = 's32[1]{0}', space=sflag, size = 0x4, scoped, tag = 'scoped memory for fcuda_gpu_cuda_speed_up_forward.2']
    #allocation4 [shape = 's32[1]{0}', space=sflag, size = 0x4, scoped, tag = 'scoped memory for fcuda_gpu_cuda_speed_up_forward.2']
    #allocation5 [shape = 'u8[65536]{0}', space=vmem, size = 0x10000, scoped, tag = 'output window, operand 0, single buffered']
    %7 = vsyncpa [#allocation3], 0
    %8 = vsyncpa [#allocation4], 0
    // Predicated region
    $region2: #{fcuda_gpu_cuda_speed_up_forward.2} parent=1 // pred_check
      _
    $region3: #{fcuda_gpu_cuda_speed_up_forward.2} parent=1 // pred_check_branch
      %10 = sbr.rel (0) target = $region5
    $region4: #{fcuda_gpu_cuda_speed_up_forward.2} parent=1 // pred_region
      _
    $region5: #{fcuda_gpu_cuda_speed_up_forward.2} parent=1 // pred_fallthru
      _
    // Predicated region
    $region6: #{fcuda_gpu_cuda_speed_up_forward.2} parent=1 // pred_check
      _
    $region7: #{fcuda_gpu_cuda_speed_up_forward.2} parent=1 // pred_check_branch
      %12 = sbr.rel (0) target = $region9
    $region8: #{fcuda_gpu_cuda_speed_up_forward.2} parent=1 // pred_region
      %s14 = ssub.s32 4096, 4096
      %15 = vsyncadd [#allocation3], %s14
      %s16 = sshll.u32 [#allocation2], 4
      %s17 = int_to_ptr.vmem [resolvable:$true] %s16
      %22 = dma.hbm_to_vmem [thread:$0]  %s1, 4096, %s17, [#allocation3], 128, 128, 8
    $region9: #{fcuda_gpu_cuda_speed_up_forward.2} parent=1 // pred_fallthru
      _
    // Predicated region
    $region10: #{fcuda_gpu_cuda_speed_up_forward.2} parent=1 // pred_check
      _
    $region11: #{fcuda_gpu_cuda_speed_up_forward.2} parent=1 // pred_check_branch
      %24 = sbr.rel (0) target = $region13
    $region12: #{fcuda_gpu_cuda_speed_up_forward.2} parent=1 // pred_region
      %25 = dma.done [#allocation3], 4096
    $region13: #{fcuda_gpu_cuda_speed_up_forward.2} parent=1 // pred_fallthru
      _
    %v26 = vld [vmem:[%s0] sm:$0xff]
    %v27 = vld [vmem:[%s0 + $0x8] sm:$0xff]
    %v28 = vld [vmem:[%s0 + $0x10] sm:$0xff]
    %v29 = vld [vmem:[%s0 + $0x18] sm:$0xff]
    %v30 = vld [vmem:[%s0 + $0x20] sm:$0xff]
    %v31 = vld [vmem:[%s0 + $0x28] sm:$0xff]
    %v32 = vld [vmem:[%s0 + $0x30] sm:$0xff]
    %v33 = vld [vmem:[%s0 + $0x38] sm:$0xff]
    %v34 = vld [vmem:[%s0 + $0x40] sm:$0xff]
    %v35 = vld [vmem:[%s0 + $0x48] sm:$0xff]
    %v36 = vld [vmem:[%s0 + $0x50] sm:$0xff]
    %v37 = vld [vmem:[%s0 + $0x58] sm:$0xff]
    %v38 = vld [vmem:[%s0 + $0x60] sm:$0xff]
    %v39 = vld [vmem:[%s0 + $0x68] sm:$0xff]
    %v40 = vld [vmem:[%s0 + $0x70] sm:$0xff]
    %v41 = vld [vmem:[%s0 + $0x78] sm:$0xff]
    %v42 = vld [vmem:[%s0 + $0x80] sm:$0xff]
    %v43 = vld [vmem:[%s0 + $0x88] sm:$0xff]
    %v44 = vld [vmem:[%s0 + $0x90] sm:$0xff]
    %v45 = vld [vmem:[%s0 + $0x98] sm:$0xff]
    %v46 = vld [vmem:[%s0 + $0xa0] sm:$0xff]
    %v47 = vld [vmem:[%s0 + $0xa8] sm:$0xff]
    %v48 = vld [vmem:[%s0 + $0xb0] sm:$0xff]
    %v49 = vld [vmem:[%s0 + $0xb8] sm:$0xff]
    %v50 = vld [vmem:[%s0 + $0xc0] sm:$0xff]
    %v51 = vld [vmem:[%s0 + $0xc8] sm:$0xff]
    %v52 = vld [vmem:[%s0 + $0xd0] sm:$0xff]
    %v53 = vld [vmem:[%s0 + $0xd8] sm:$0xff]
    %v54 = vld [vmem:[%s0 + $0xe0] sm:$0xff]
    %v55 = vld [vmem:[%s0 + $0xe8] sm:$0xff]
    %v56 = vld [vmem:[%s0 + $0xf0] sm:$0xff]
    %v57 = vld [vmem:[%s0 + $0xf8] sm:$0xff]
    %v58 = vld [vmem:[#allocation2] sm:$0xff]
    %v59 = vld [vmem:[#allocation2 + $0x8] sm:$0xff]
    %v60 = vld [vmem:[#allocation2 + $0x10] sm:$0xff]
    %v61 = vld [vmem:[#allocation2 + $0x18] sm:$0xff]
    %v62 = vld [vmem:[#allocation2 + $0x20] sm:$0xff]
    %v63 = vld [vmem:[#allocation2 + $0x28] sm:$0xff]
    %v64 = vld [vmem:[#allocation2 + $0x30] sm:$0xff]
    %v65 = vld [vmem:[#allocation2 + $0x38] sm:$0xff]
    %v66 = vld [vmem:[#allocation2 + $0x40] sm:$0xff]
    %v67 = vld [vmem:[#allocation2 + $0x48] sm:$0xff]
    %v68 = vld [vmem:[#allocation2 + $0x50] sm:$0xff]
    %v69 = vld [vmem:[#allocation2 + $0x58] sm:$0xff]
    %v70 = vld [vmem:[#allocation2 + $0x60] sm:$0xff]
    %v71 = vld [vmem:[#allocation2 + $0x68] sm:$0xff]
    %v72 = vld [vmem:[#allocation2 + $0x70] sm:$0xff]
    %v73 = vld [vmem:[#allocation2 + $0x78] sm:$0xff]
    %v74 = vld [vmem:[#allocation2 + $0x80] sm:$0xff]
    %v75 = vld [vmem:[#allocation2 + $0x88] sm:$0xff]
    %v76 = vld [vmem:[#allocation2 + $0x90] sm:$0xff]
    %v77 = vld [vmem:[#allocation2 + $0x98] sm:$0xff]
    %v78 = vld [vmem:[#allocation2 + $0xa0] sm:$0xff]
    %v79 = vld [vmem:[#allocation2 + $0xa8] sm:$0xff]
    %v80 = vld [vmem:[#allocation2 + $0xb0] sm:$0xff]
    %v81 = vld [vmem:[#allocation2 + $0xb8] sm:$0xff]
    %v82 = vld [vmem:[#allocation2 + $0xc0] sm:$0xff]
    %v83 = vld [vmem:[#allocation2 + $0xc8] sm:$0xff]
    %v84 = vld [vmem:[#allocation2 + $0xd0] sm:$0xff]
    %v85 = vld [vmem:[#allocation2 + $0xd8] sm:$0xff]
    %v86 = vld [vmem:[#allocation2 + $0xe0] sm:$0xff]
    %v87 = vld [vmem:[#allocation2 + $0xe8] sm:$0xff]
    %v88 = vld [vmem:[#allocation2 + $0xf0] sm:$0xff]
    %v89 = vld [vmem:[#allocation2 + $0xf8] sm:$0xff]
    %90 = vmatprep.subr.mxu0 0.0
    %91 = vmatpush1.msra.mxu0 %v58
    %92 = vmatprep.subr.mxu0 0.0
    %93 = vmatpush1.msra.mxu0 %v59
    %94 = vmatprep.subr.mxu0 0.0
    %95 = vmatpush1.msra.mxu0 %v60
    %96 = vmatprep.subr.mxu0 0.0
    %97 = vmatpush1.msra.mxu0 %v61
    %98 = vmatprep.subr.mxu0 0.0
    %99 = vmatpush1.msra.mxu0 %v62
    %100 = vmatprep.subr.mxu0 0.0
    %101 = vmatpush1.msra.mxu0 %v63
    %102 = vmatprep.subr.mxu0 0.0
    %103 = vmatpush1.msra.mxu0 %v64
    %104 = vmatprep.subr.mxu0 0.0
    %105 = vmatpush1.msra.mxu0 %v65
    %106 = vmatprep.subr.mxu0 0.0
    %107 = vmatpush1.msra.mxu0 %v66
    %108 = vmatprep.subr.mxu0 0.0
    %109 = vmatpush1.msra.mxu0 %v67
    %110 = vmatprep.subr.mxu0 0.0
    %111 = vmatpush1.msra.mxu0 %v68
    %112 = vmatprep.subr.mxu0 0.0
    %113 = vmatpush1.msra.mxu0 %v69
    %114 = vmatprep.subr.mxu0 0.0
    %115 = vmatpush1.msra.mxu0 %v70
    %116 = vmatprep.subr.mxu0 0.0
    %117 = vmatpush1.msra.mxu0 %v71
    %118 = vmatprep.subr.mxu0 0.0
    %119 = vmatpush1.msra.mxu0 %v72
    %120 = vmatprep.subr.mxu0 0.0
    %121 = vmatpush1.msra.mxu0 %v73
    %122 = vmatprep.subr.mxu0 0.0
    %123 = vmatpush1.msra.mxu0 %v74
    %124 = vmatprep.subr.mxu0 0.0
    %125 = vmatpush1.msra.mxu0 %v75
    %126 = vmatprep.subr.mxu0 0.0
    %127 = vmatpush1.msra.mxu0 %v76
    %128 = vmatprep.subr.mxu0 0.0
    %129 = vmatpush1.msra.mxu0 %v77
    %130 = vmatprep.subr.mxu0 0.0
    %131 = vmatpush1.msra.mxu0 %v78
    %132 = vmatprep.subr.mxu0 0.0
    %133 = vmatpush1.msra.mxu0 %v79
    %134 = vmatprep.subr.mxu0 0.0
    %135 = vmatpush1.msra.mxu0 %v80
    %136 = vmatprep.subr.mxu0 0.0
    %137 = vmatpush1.msra.mxu0 %v81
    %138 = vmatprep.subr.mxu0 0.0
    %139 = vmatpush1.msra.mxu0 %v82
    %140 = vmatprep.subr.mxu0 0.0
    %141 = vmatpush1.msra.mxu0 %v83
    %142 = vmatprep.subr.mxu0 0.0
    %143 = vmatpush1.msra.mxu0 %v84
    %144 = vmatprep.subr.mxu0 0.0
    %145 = vmatpush1.msra.mxu0 %v85
    %146 = vmatprep.subr.mxu0 0.0
    %147 = vmatpush1.msra.mxu0 %v86
    %148 = vmatprep.subr.mxu0 0.0
    %149 = vmatpush1.msra.mxu0 %v87
    %150 = vmatprep.subr.mxu0 0.0
    %151 = vmatpush1.msra.mxu0 %v88
    %152 = vmatprep.subr.mxu0 0.0
    %153 = vmatpush1.msra.mxu0 %v89
    %154 = vmatprep.mubr.f32.mxu0 %v27
    %155 = vmatmul.mubr.f32.gmra.mrb[0].mxu0 %v26
    %v156 = vpop.f32.mrb[0].mxu0
    %v157 = vadd.f32 0.0, %v156
    %v158 = vpop.f32.mrb[0].mxu0
    %159 = vmatprep.mubr.f32.mxu0 %v29
    %160 = vmatmul.mubr.f32.gmra.mrb[0].mxu0 %v28
    %v161 = vpop.f32.mrb[0].mxu0
    %v162 = vadd.f32 0.0, %v161
    %v163 = vpop.f32.mrb[0].mxu0
    %164 = vmatprep.mubr.f32.mxu0 %v31
    %165 = vmatmul.mubr.f32.gmra.mrb[0].mxu0 %v30
    %v166 = vpop.f32.mrb[0].mxu0
    %v167 = vadd.f32 0.0, %v166
    %v168 = vpop.f32.mrb[0].mxu0
    %169 = vmatprep.mubr.f32.mxu0 %v33
    %170 = vmatmul.mubr.f32.gmra.mrb[0].mxu0 %v32
    %v171 = vpop.f32.mrb[0].mxu0
    %v172 = vadd.f32 0.0, %v171
    %v173 = vpop.f32.mrb[0].mxu0
    %174 = vmatprep.mubr.f32.mxu0 %v35
    %175 = vmatmul.mubr.f32.gmra.mrb[0].mxu0 %v34
    %v176 = vpop.f32.mrb[0].mxu0
    %v177 = vadd.f32 0.0, %v176
    %v178 = vpop.f32.mrb[0].mxu0
    %179 = vmatprep.mubr.f32.mxu0 %v37
    %180 = vmatmul.mubr.f32.gmra.mrb[0].mxu0 %v36
    %v181 = vpop.f32.mrb[0].mxu0
    %v182 = vadd.f32 0.0, %v181
    %v183 = vpop.f32.mrb[0].mxu0
    %184 = vmatprep.mubr.f32.mxu0 %v39
    %185 = vmatmul.mubr.f32.gmra.mrb[0].mxu0 %v38
    %v186 = vpop.f32.mrb[0].mxu0
    %v187 = vadd.f32 0.0, %v186
    %v188 = vpop.f32.mrb[0].mxu0
    %189 = vmatprep.mubr.f32.mxu0 %v41
    %190 = vmatmul.mubr.f32.gmra.mrb[0].mxu0 %v40
    %v191 = vpop.f32.mrb[0].mxu0
    %v192 = vadd.f32 0.0, %v191
    %v193 = vpop.f32.mrb[0].mxu0
    %194 = vmatprep.mubr.f32.mxu0 %v43
    %195 = vmatmul.mubr.f32.gmra.mrb[0].mxu0 %v42
    %v196 = vpop.f32.mrb[0].mxu0
    %v197 = vadd.f32 0.0, %v196
    %v198 = vpop.f32.mrb[0].mxu0
    %199 = vmatprep.mubr.f32.mxu0 %v45
    %200 = vmatmul.mubr.f32.gmra.mrb[0].mxu0 %v44
    %v201 = vpop.f32.mrb[0].mxu0
    %v202 = vadd.f32 0.0, %v201
    %v203 = vpop.f32.mrb[0].mxu0
    %204 = vmatprep.mubr.f32.mxu0 %v47
    %205 = vmatmul.mubr.f32.gmra.mrb[0].mxu0 %v46
    %v206 = vpop.f32.mrb[0].mxu0
    %v207 = vadd.f32 0.0, %v206
    %v208 = vpop.f32.mrb[0].mxu0
    %209 = vmatprep.mubr.f32.mxu0 %v49
    %210 = vmatmul.mubr.f32.gmra.mrb[0].mxu0 %v48
    %v211 = vpop.f32.mrb[0].mxu0
    %v212 = vadd.f32 0.0, %v211
    %v213 = vpop.f32.mrb[0].mxu0
    %214 = vmatprep.mubr.f32.mxu0 %v51
    %215 = vmatmul.mubr.f32.gmra.mrb[0].mxu0 %v50
    %v216 = vpop.f32.mrb[0].mxu0
    %v217 = vadd.f32 0.0, %v216
    %v218 = vpop.f32.mrb[0].mxu0
    %219 = vmatprep.mubr.f32.mxu0 %v53
    %220 = vmatmul.mubr.f32.gmra.mrb[0].mxu0 %v52
    %v221 = vpop.f32.mrb[0].mxu0
    %v222 = vadd.f32 0.0, %v221
    %v223 = vpop.f32.mrb[0].mxu0
    %224 = vmatprep.mubr.f32.mxu0 %v55
    %225 = vmatmul.mubr.f32.gmra.mrb[0].mxu0 %v54
    %v226 = vpop.f32.mrb[0].mxu0
    %v227 = vadd.f32 0.0, %v226
    %v228 = vpop.f32.mrb[0].mxu0
    %229 = vmatprep.mubr.f32.mxu0 %v57
    %230 = vmatmul.mubr.f32.gmra.mrb[0].mxu0 %v56
    %v231 = vpop.f32.mrb[0].mxu0
    %v232 = vadd.f32 0.0, %v231
    %v233 = vpop.f32.mrb[0].mxu0
    %234 = vdwg.mxu0
    %235 = vst [vmem:[#allocation5] sm:$0xff] %v157
    %236 = vst [vmem:[#allocation5 + $0x8] sm:$0xff] %v162
    %237 = vst [vmem:[#allocation5 + $0x10] sm:$0xff] %v167
    %238 = vst [vmem:[#allocation5 + $0x18] sm:$0xff] %v172
    %239 = vst [vmem:[#allocation5 + $0x20] sm:$0xff] %v177
    %240 = vst [vmem:[#allocation5 + $0x28] sm:$0xff] %v182
    %241 = vst [vmem:[#allocation5 + $0x30] sm:$0xff] %v187
    %242 = vst [vmem:[#allocation5 + $0x38] sm:$0xff] %v192
    %243 = vst [vmem:[#allocation5 + $0x40] sm:$0xff] %v197
    %244 = vst [vmem:[#allocation5 + $0x48] sm:$0xff] %v202
    %245 = vst [vmem:[#allocation5 + $0x50] sm:$0xff] %v207
    %246 = vst [vmem:[#allocation5 + $0x58] sm:$0xff] %v212
    %247 = vst [vmem:[#allocation5 + $0x60] sm:$0xff] %v217
    %248 = vst [vmem:[#allocation5 + $0x68] sm:$0xff] %v222
    %249 = vst [vmem:[#allocation5 + $0x70] sm:$0xff] %v227
    %250 = vst [vmem:[#allocation5 + $0x78] sm:$0xff] %v232
    // Predicated region
    $region14: #{fcuda_gpu_cuda_speed_up_forward.2} parent=1 // pred_check
      _
    $region15: #{fcuda_gpu_cuda_speed_up_forward.2} parent=1 // pred_check_branch
      %252 = sbr.rel (0) target = $region17
    $region16: #{fcuda_gpu_cuda_speed_up_forward.2} parent=1 // pred_region
      %s254 = ssub.s32 2048, 2048
      %255 = vsyncadd [#allocation4], %s254
      %s256 = sshll.u32 [#allocation5], 4
      %s257 = int_to_ptr.vmem [resolvable:$true] %s256
      %262 = dma.vmem_to_hbm [thread:$0]  %s257, 2048, %s2, [#allocation4], 128, 128, 8
    $region17: #{fcuda_gpu_cuda_speed_up_forward.2} parent=1 // pred_fallthru
      _
    // Predicated region
    $region18: #{fcuda_gpu_cuda_speed_up_forward.2} parent=1 // pred_check
      _
    $region19: #{fcuda_gpu_cuda_speed_up_forward.2} parent=1 // pred_check_branch
      %264 = sbr.rel (0) target = $region21
    $region20: #{fcuda_gpu_cuda_speed_up_forward.2} parent=1 // pred_region
      %265 = dma.done [#allocation4], 2048
    $region21: #{fcuda_gpu_cuda_speed_up_forward.2} parent=1 // pred_fallthru
      _
    %266 = vsyncpa [#allocation3], 1
    %267 = vsyncpa [#allocation4], 1

</llo_original>
